<compile_context>
chip_gen: v6e
topology: v6e:2x2x1
jax: 0.10.0
libtpu: 0.0.40
codegen_flags: <defaults>
</compile_context>

<pallas_src>
import functools

import jax
import jax.numpy as jnp
from jax.experimental import pallas as pl
from jax.experimental.pallas import tpu as pltpu


def _round_up(x, m):
    return ((x + m - 1) // m) * m


def _cdiv(a, b):
    return (a + b - 1) // b


def _vmem_capacity_bytes():
    """Physical VMEM per TensorCore (generation-aware), with a safe fallback."""
    try:
        info = pltpu.get_tpu_info()
        cap = getattr(info, "vmem_capacity_bytes", None)
        if cap:
            return int(cap)
    except Exception:
        pass
    return 128 * 1024 * 1024  # v5e / v6e


def ffn_kernel(x_ref, gamma_ref, beta_ref, w1_ref, b1_ref, w2_ref, b2_ref,
               o_ref, xnorm_ref, *acc_scratch, eps):
    """Grid = (row_tiles, ff_tiles); axis 1 (d_ff) is the reduction axis.

    When the output dtype is f32 the accumulator *is* o_ref (it is resident across
    the f axis because its block index is (i, 0)); otherwise a separate f32 VMEM
    scratch ref is passed via acc_scratch.
    """
    ff = pl.program_id(1)
    n_ff = pl.num_programs(1)
    acc_ref = acc_scratch[0] if acc_scratch else o_ref

    # ---- once per row tile: LayerNorm (torch-module semantics, unbiased std) ----
    @pl.when(ff == 0)
    def _():
        x = x_ref[...].astype(jnp.float32)                       # [TR, D]
        d = x.shape[-1]
        mean = jnp.mean(x, axis=-1, keepdims=True)
        centered = x - mean
        var_unbiased = jnp.sum(centered * centered, axis=-1, keepdims=True) / (d - 1)
        std = jnp.sqrt(var_unbiased)
        inv = pl.reciprocal(std + eps, approx=False)             # exact 1/(std+eps)
        scale = gamma_ref[...].astype(jnp.float32) * inv         # fold gamma * 1/(std+eps)
        x_norm = centered * scale + beta_ref[...].astype(jnp.float32)
        xnorm_ref[...] = x_norm.astype(xnorm_ref.dtype)

    # ---- per d_ff slice: relu(x_norm @ W1[:, sl] + b1[sl]) @ W2[sl, :] ----
    h = jnp.dot(xnorm_ref[...], w1_ref[...], preferred_element_type=jnp.float32)
    h = jnp.maximum(h + b1_ref[...].astype(jnp.float32), 0.0)
    contrib = jnp.dot(h.astype(w2_ref.dtype), w2_ref[...],
                      preferred_element_type=jnp.float32)

    # init-on-first-dot: avoids the zeros store + redundant read-modify-write at ff==0
    @pl.when(ff == 0)
    def _():
        acc_ref[...] = contrib.astype(acc_ref.dtype)

    @pl.when(ff > 0)
    def _():
        acc_ref[...] = (acc_ref[...].astype(jnp.float32) + contrib).astype(acc_ref.dtype)

    # ---- once per row tile: bias, residual, cast, store ----
    @pl.when(ff == n_ff - 1)
    def _():
        out = (acc_ref[...].astype(jnp.float32)
               + b2_ref[...].astype(jnp.float32)
               + x_ref[...].astype(jnp.float32))
        o_ref[...] = out.astype(o_ref.dtype)


def positionwise_ffn(x, gamma, beta, w1, b1, w2, b2, *, eps=1e-6,
                     bit_exact=False, matmul_dtype=None,
                     tile_rows=None, tile_ff=None,
                     vmem_limit_bytes=None, ff_buffering=None):
    """x: [B, S, D] -> [B, S, D].  w1: [D, d_ff], w2: [d_ff, D] (transposed nn.Linear weights)."""
    B, S, D = x.shape
    d_ff = w1.shape[1]
    rows = B * S

    x_dtype = jnp.dtype(x.dtype)
    if matmul_dtype is None:
        # MXU is bf16-native on v5e/v6e/v7x; keep f32 matmuls only behind `bit_exact`.
        matmul_dtype = jnp.float32 if bit_exact else jnp.bfloat16
    matmul_dtype = jnp.dtype(matmul_dtype)

    out_is_f32 = x_dtype == jnp.dtype(jnp.float32)
    use_acc_scratch = not out_is_f32          # f32 outputs accumulate directly into o_ref

    # sublane tile: 8 for 4-byte, 16 for 2-byte data
    sublane = 16 if (matmul_dtype.itemsize == 2 or x_dtype.itemsize == 2) else 8
    rows_up = _round_up(rows, sublane)

    # ---- generation-aware VMEM budget ----
    if vmem_limit_bytes is None:
        cap = _vmem_capacity_bytes()
        # ≈56 MiB on 128-MiB parts (v5e/v6e), ≈35 MiB on 64-MiB v7x.
        vmem_limit_bytes = min(int(0.55 * cap), 56 * 1024 * 1024)
    budget = int(0.85 * vmem_limit_bytes)     # slack for Mosaic internal scratch

    x_isize = x_dtype.itemsize
    w_isize = matmul_dtype.itemsize

    def tile_bytes(tr, tff):
        io = 2 * tr * D * (x_isize + x_isize)        # x + out, double-buffered
        w = 4 * tff * D * w_isize                    # W1 + W2, double-buffered
        scratch = tr * D * matmul_dtype.itemsize     # x_norm scratch
        if use_acc_scratch:
            scratch += tr * D * 4                    # separate f32 accumulator
        hidden = tr * tff * 4                        # h intermediate (worst case in VMEM)
        small = 4 * (tff + 3 * D) * 4                # biases / gamma / beta
        return io + w + scratch + hidden + small

    # ---- tile_ff candidates: resident weights first, then 256-aligned, then 128 ----
    if tile_ff is not None:
        assert tile_ff == d_ff or (d_ff % tile_ff == 0 and tile_ff % 128 == 0), \
            "tile_ff must divide d_ff and be a multiple of 128 (or equal d_ff)"
        ff_cands = [tile_ff]
    else:
        ff_cands = [d_ff]
        for cand in (1024, 768, 512, 256):           # 256-aligned (v6e/v7x 2x256^2 MXU)
            if cand < d_ff and d_ff % cand == 0 and cand not in ff_cands:
                ff_cands.append(cand)
        for cand in (384, 128):                      # 128-granularity fallback (v5e MXU)
            if cand < d_ff and d_ff % cand == 0 and cand not in ff_cands:
                ff_cands.append(cand)

    if tile_rows is not None:
        max_rows = max(sublane, min(_round_up(tile_rows, sublane), rows_up))
    else:
        max_rows = max(sublane, min(1024, rows_up))

    def max_rows_fitting(tff):
        tr = max_rows
        while True:
            if tile_bytes(tr, tff) <= budget:
                return tr
            if tr <= sublane:
                return None
            tr = max(sublane, _round_up(tr // 2, sublane))

    candidates = []
    for tff in ff_cands:
        tr = max_rows_fitting(tff)
        if tr is not None:
            candidates.append((tr, tff))

    if not candidates:
        sel_rows, sel_ff = sublane, ff_cands[-1]     # last resort; vmem limit will arbitrate
    else:
        # Prefer resident weights (fetched exactly once) when they still allow a decent
        # row tile; otherwise take the candidate with the most rows (amortizes the
        # per-row-tile weight re-streaming), ties broken toward larger tile_ff.
        resident = next((c for c in candidates if c[1] == d_ff), None)
        if resident is not None and resident[0] >= min(256, max_rows):
            sel_rows, sel_ff = resident
        else:
            sel_rows, sel_ff = max(candidates, key=lambda c: (c[0], c[1]))

    # v7x megacore: a single row tile leaves one of the 2 TensorCores idle. Splitting is
    # free when weights are resident (no extra weight traffic), so do it automatically.
    if (tile_rows is None and sel_ff == d_ff
            and sel_rows >= rows_up and rows_up >= 2 * sublane):
        sel_rows = max(sublane, _round_up(_cdiv(rows, 2), sublane))

    tile_rows = sel_rows
    tile_ff = sel_ff
    rows_padded = _round_up(rows, tile_rows)
    n_row_tiles = rows_padded // tile_rows
    n_ff = d_ff // tile_ff

    # 2D operands
    x2 = x.reshape(rows, D)
    if rows_padded != rows:
        x2 = jnp.pad(x2, ((0, rows_padded - rows), (0, 0)))
    gamma2 = gamma.reshape(1, D)
    beta2 = beta.reshape(1, D)
    b1_2 = b1.reshape(1, d_ff)
    b2_2 = b2.reshape(1, D)
    w1c = w1.astype(matmul_dtype)
    w2c = w2.astype(matmul_dtype)

    kernel = functools.partial(ffn_kernel, eps=eps)

    # Weights are streamed once if resident, once per row tile if tiled over d_ff.
    weight_passes = 1 if tile_ff == d_ff else n_row_tiles
    cost = pl.CostEstimate(
        flops=4 * rows_padded * D * d_ff,                  # two matmuls
        transcendentals=2 * rows_padded,                   # sqrt + reciprocal per row
        bytes_accessed=(2 * rows_padded * D * x_isize      # x in, out
                        + weight_passes * 2 * D * d_ff * w_isize
                        + (3 * D + d_ff) * 4),
    )

    ff_mode = None
    if ff_buffering is not None and tile_ff < d_ff:
        ff_mode = pl.Buffered(ff_buffering)

    def wspec(shape, index_map):
        if ff_mode is not None:
            return pl.BlockSpec(shape, index_map, pipeline_mode=ff_mode)
        return pl.BlockSpec(shape, index_map)

    in_specs = [
        pl.BlockSpec((tile_rows, D), lambda i, f: (i, 0)),   # x rows tile (resident over f)
        pl.BlockSpec((1, D), lambda i, f: (0, 0)),           # gamma
        pl.BlockSpec((1, D), lambda i, f: (0, 0)),           # beta
        wspec((D, tile_ff), lambda i, f: (0, f)),            # W1 column slice
        wspec((1, tile_ff), lambda i, f: (0, f)),            # b1 slice
        wspec((tile_ff, D), lambda i, f: (f, 0)),            # W2 row slice
        pl.BlockSpec((1, D), lambda i, f: (0, 0)),           # b2
    ]

    scratch_shapes = [pltpu.VMEM((tile_rows, D), matmul_dtype)]   # x_norm (reused across f)
    if use_acc_scratch:
        scratch_shapes.append(pltpu.VMEM((tile_rows, D), jnp.float32))

    out = pl.pallas_call(
        kernel,
        out_shape=jax.ShapeDtypeStruct((rows_padded, D), x.dtype),
        grid_spec=pltpu.PrefetchScalarGridSpec(
            num_scalar_prefetch=0,
            grid=(n_row_tiles, n_ff),
            in_specs=in_specs,
            out_specs=pl.BlockSpec((tile_rows, D), lambda i, f: (i, 0)),
            scratch_shapes=scratch_shapes,
        ),
        compiler_params=pltpu.CompilerParams(
            dimension_semantics=("parallel", "arbitrary"),
            vmem_limit_bytes=vmem_limit_bytes,
        ),
        cost_estimate=cost,
    )(x2, gamma2, beta2, w1c, b1_2, w2c, b2_2)

    return out[:rows].reshape(B, S, D)


def reference_ffn(x, gamma, beta, w1, b1, w2, b2, eps=1e-6):
    xf = x.astype(jnp.float32)
    d = xf.shape[-1]
    mean = jnp.mean(xf, axis=-1, keepdims=True)
    c = xf - mean
    std = jnp.sqrt(jnp.sum(c * c, axis=-1, keepdims=True) / (d - 1))
    xn = gamma * c / (std + eps) + beta
    h = jnp.maximum(xn @ w1 + b1, 0.0)
    y = h @ w2 + b2
    return (y + xf).astype(x.dtype)


if __name__ == "__main__":
    key = jax.random.PRNGKey(0)
    # Small but lane-friendly shapes: [batch, input_len, model_dim]
    B, S, d_model, d_ff = 2, 8, 128, 256

    k_x, k_w1, k_b1, k_w2, k_b2 = jax.random.split(key, 5)

    x = jax.random.normal(k_x, (B, S, d_model), dtype=jnp.float32)

    # nn.Linear(d_model, d_ff): torch weight is [d_ff, d_model]; we store the transpose.
    bound1 = 1.0 / (d_model ** 0.5)
    w1 = jax.random.uniform(k_w1, (d_model, d_ff), minval=-bound1, maxval=bound1, dtype=jnp.float32)
    b1 = jax.random.uniform(k_b1, (d_ff,), minval=-bound1, maxval=bound1, dtype=jnp.float32)

    bound2 = 1.0 / (d_ff ** 0.5)
    w2 = jax.random.uniform(k_w2, (d_ff, d_model), minval=-bound2, maxval=bound2, dtype=jnp.float32)
    b2 = jax.random.uniform(k_b2, (d_model,), minval=-bound2, maxval=bound2, dtype=jnp.float32)

    # LayerNorm params as in __init__: a_2 = ones, b_2 = zeros.
    gamma = jnp.ones((d_model,), dtype=jnp.float32)
    beta = jnp.zeros((d_model,), dtype=jnp.float32)

    ref = reference_ffn(x, gamma, beta, w1, b1, w2, b2)

    # 1) Default path: bf16 MXU matmuls (f32 accumulation), weights VMEM-resident
    #    (tile_ff == d_ff -> constant weight index maps, fetched once).
    out_bf16 = positionwise_ffn(x, gamma, beta, w1, b1, w2, b2)
    out_bf16 = jax.block_until_ready(out_bf16)
    assert out_bf16.shape == (B, S, d_model)
    assert jnp.allclose(out_bf16, ref, atol=3e-1, rtol=1e-1)

    # 2) Bit-exact f32 path with d_ff tiled (tile_ff=128 -> 2 reduction steps); the f32
    #    accumulator lives directly in the resident output block (no acc scratch).
    out_f32 = positionwise_ffn(x, gamma, beta, w1, b1, w2, b2,
                               bit_exact=True, tile_ff=128)
    out_f32 = jax.block_until_ready(out_f32)
    assert jnp.allclose(out_f32, ref, atol=1e-5, rtol=1e-5)

    # 3) bf16 inputs/outputs (exercises the separate f32 accumulator scratch path).
    x16 = x.astype(jnp.bfloat16)
    ref16 = reference_ffn(x16, gamma, beta, w1, b1, w2, b2)
    out16 = positionwise_ffn(x16, gamma, beta, w1, b1, w2, b2, tile_ff=128)
    out16 = jax.block_until_ready(out16)
    assert jnp.allclose(out16.astype(jnp.float32), ref16.astype(jnp.float32),
                        atol=3e-1, rtol=1e-1)

    print("KERNEL_OK")
</pallas_src>

<mosaic_0001>
module attributes {stable_mosaic.version = 11 : i64} {
  func.func @ffn_kernel(%arg0: i32, %arg1: i32, %arg2: memref<16x128xf32, #tpu.memory_space<vmem>>, %arg3: memref<1x128xf32, #tpu.memory_space<vmem>>, %arg4: memref<1x128xf32, #tpu.memory_space<vmem>>, %arg5: memref<128x256xbf16, #tpu.memory_space<vmem>>, %arg6: memref<1x256xf32, #tpu.memory_space<vmem>>, %arg7: memref<256x128xbf16, #tpu.memory_space<vmem>>, %arg8: memref<1x128xf32, #tpu.memory_space<vmem>>, %arg9: memref<16x128xf32, #tpu.memory_space<vmem>>, %arg10: memref<16x128xbf16, #tpu.memory_space<vmem>>) attributes {dimension_semantics = [#tpu.dimension_semantics<parallel>, #tpu.dimension_semantics<arbitrary>], iteration_bounds = array<i64: 1, 1>, scalar_prefetch = 0 : i64, scratch_operands = 1 : i64, tpu.core_type = #tpu.core_type<tc>, window_params = [{transform_indices = @transform_0, window_bounds = array<i64: 16, 128>}, {pipeline_mode = #tpu.pipeline_mode<synchronous>, transform_indices = @transform_1, window_bounds = array<i64: 1, 128>}, {pipeline_mode = #tpu.pipeline_mode<synchronous>, transform_indices = @transform_2, window_bounds = array<i64: 1, 128>}, {transform_indices = @transform_3, window_bounds = array<i64: 128, 256>}, {transform_indices = @transform_4, window_bounds = array<i64: 1, 256>}, {transform_indices = @transform_5, window_bounds = array<i64: 256, 128>}, {pipeline_mode = #tpu.pipeline_mode<synchronous>, transform_indices = @transform_6, window_bounds = array<i64: 1, 128>}, {transform_indices = @transform_7, window_bounds = array<i64: 16, 128>}]} {
    %c0_i32 = arith.constant 0 : i32
    %0 = arith.cmpi eq, %arg1, %c0_i32 : i32
    %1 = arith.extui %0 : i1 to i32
    %c0_i32_0 = arith.constant 0 : i32
    %2 = arith.cmpi ne, %1, %c0_i32_0 : i32
    scf.if %2 {
      %c0_16 = arith.constant 0 : index
      %c0_17 = arith.constant 0 : index
      %23 = vector.load %arg2[%c0_16, %c0_17] : memref<16x128xf32, #tpu.memory_space<vmem>>, vector<16x128xf32>
      %cst_18 = arith.constant dense<0.000000e+00> : vector<16xf32>
      %24 = vector.multi_reduction <add>, %23, %cst_18 [1] : vector<16x128xf32> to vector<16xf32>
      %25 = vector.shape_cast %24 : vector<16xf32> to vector<16x1xf32>
      %cst_19 = arith.constant 1.280000e+02 : f32
      %26 = vector.broadcast %cst_19 : f32 to vector<16x1xf32>
      %27 = arith.divf %25, %26 : vector<16x1xf32>
      %28 = vector.broadcast %27 : vector<16x1xf32> to vector<16x128xf32>
      %29 = arith.subf %23, %28 : vector<16x128xf32>
      %30 = arith.mulf %29, %29 : vector<16x128xf32>
      %cst_20 = arith.constant dense<0.000000e+00> : vector<16xf32>
      %31 = vector.multi_reduction <add>, %30, %cst_20 [1] : vector<16x128xf32> to vector<16xf32>
      %32 = vector.shape_cast %31 : vector<16xf32> to vector<16x1xf32>
      %cst_21 = arith.constant 1.270000e+02 : f32
      %33 = vector.broadcast %cst_21 : f32 to vector<16x1xf32>
      %34 = arith.divf %32, %33 : vector<16x1xf32>
      %35 = math.sqrt %34 : vector<16x1xf32>
      %cst_22 = arith.constant 9.99999997E-7 : f32
      %36 = vector.broadcast %cst_22 : f32 to vector<16x1xf32>
      %37 = arith.addf %35, %36 : vector<16x1xf32>
      %38 = tpu.reciprocal %37 : vector<16x1xf32> -> vector<16x1xf32>
      %c0_23 = arith.constant 0 : index
      %c0_24 = arith.constant 0 : index
      %39 = vector.load %arg3[%c0_23, %c0_24] : memref<1x128xf32, #tpu.memory_space<vmem>>, vector<1x128xf32>
      %40 = vector.broadcast %39 : vector<1x128xf32> to vector<16x128xf32>
      %41 = vector.broadcast %38 : vector<16x1xf32> to vector<16x128xf32>
      %42 = arith.mulf %40, %41 : vector<16x128xf32>
      %43 = arith.mulf %29, %42 : vector<16x128xf32>
      %c0_25 = arith.constant 0 : index
      %c0_26 = arith.constant 0 : index
      %44 = vector.load %arg4[%c0_25, %c0_26] : memref<1x128xf32, #tpu.memory_space<vmem>>, vector<1x128xf32>
      %45 = vector.broadcast %44 : vector<1x128xf32> to vector<16x128xf32>
      %46 = arith.addf %43, %45 : vector<16x128xf32>
      %47 = arith.truncf %46 : vector<16x128xf32> to vector<16x128xbf16>
      %c0_27 = arith.constant 0 : index
      %c0_28 = arith.constant 0 : index
      %48 = vector.load %arg10[%c0_27, %c0_28] : memref<16x128xbf16, #tpu.memory_space<vmem>>, vector<16x128xbf16>
      tpu.vector_store %arg10[%c0_27, %c0_28], %47 {strides = array<i32>} : memref<16x128xbf16, #tpu.memory_space<vmem>>, vector<16x128xbf16>,
    } else {
    }
    %c0 = arith.constant 0 : index
    %c0_1 = arith.constant 0 : index
    %3 = vector.load %arg10[%c0, %c0_1] : memref<16x128xbf16, #tpu.memory_space<vmem>>, vector<16x128xbf16>
    %c0_2 = arith.constant 0 : index
    %c0_3 = arith.constant 0 : index
    %4 = vector.load %arg5[%c0_2, %c0_3] : memref<128x256xbf16, #tpu.memory_space<vmem>>, vector<128x256xbf16>
    %cst = arith.constant dense<0.000000e+00> : vector<16x256xf32>
    %5 = tpu.matmul %3, %4, %cst {dimension_numbers = #tpu.dot_dimension_numbers<[1], [0], [0], [1], [0, 0, 1, 1], [], []>} : vector<16x128xbf16>, vector<128x256xbf16>, vector<16x256xf32> -> vector<16x256xf32>
    %c0_4 = arith.constant 0 : index
    %c0_5 = arith.constant 0 : index
    %6 = vector.load %arg6[%c0_4, %c0_5] : memref<1x256xf32, #tpu.memory_space<vmem>>, vector<1x256xf32>
    %7 = vector.broadcast %6 : vector<1x256xf32> to vector<16x256xf32>
    %8 = arith.addf %5, %7 : vector<16x256xf32>
    %cst_6 = arith.constant 0.000000e+00 : f32
    %9 = vector.broadcast %cst_6 : f32 to vector<16x256xf32>
    %10 = arith.maximumf %8, %9 : vector<16x256xf32>
    %11 = arith.truncf %10 : vector<16x256xf32> to vector<16x256xbf16>
    %c0_7 = arith.constant 0 : index
    %c0_8 = arith.constant 0 : index
    %12 = vector.load %arg7[%c0_7, %c0_8] : memref<256x128xbf16, #tpu.memory_space<vmem>>, vector<256x128xbf16>
    %cst_9 = arith.constant dense<0.000000e+00> : vector<16x128xf32>
    %13 = tpu.matmul %11, %12, %cst_9 {dimension_numbers = #tpu.dot_dimension_numbers<[1], [0], [0], [1], [0, 0, 1, 1], [], []>} : vector<16x256xbf16>, vector<256x128xbf16>, vector<16x128xf32> -> vector<16x128xf32>
    %c0_i32_10 = arith.constant 0 : i32
    %14 = arith.cmpi eq, %arg1, %c0_i32_10 : i32
    %15 = arith.extui %14 : i1 to i32
    %c0_i32_11 = arith.constant 0 : i32
    %16 = arith.cmpi ne, %15, %c0_i32_11 : i32
    scf.if %16 {
      %c0_16 = arith.constant 0 : index
      %c0_17 = arith.constant 0 : index
      %23 = vector.load %arg9[%c0_16, %c0_17] : memref<16x128xf32, #tpu.memory_space<vmem>>, vector<16x128xf32>
      tpu.vector_store %arg9[%c0_16, %c0_17], %13 {strides = array<i32>} : memref<16x128xf32, #tpu.memory_space<vmem>>, vector<16x128xf32>,
    } else {
    }
    %c0_i32_12 = arith.constant 0 : i32
    %17 = arith.cmpi sgt, %arg1, %c0_i32_12 : i32
    %18 = arith.extui %17 : i1 to i32
    %c0_i32_13 = arith.constant 0 : i32
    %19 = arith.cmpi ne, %18, %c0_i32_13 : i32
    scf.if %19 {
      %c0_16 = arith.constant 0 : index
      %c0_17 = arith.constant 0 : index
      %23 = vector.load %arg9[%c0_16, %c0_17] : memref<16x128xf32, #tpu.memory_space<vmem>>, vector<16x128xf32>
      %24 = arith.addf %23, %13 : vector<16x128xf32>
      %c0_18 = arith.constant 0 : index
      %c0_19 = arith.constant 0 : index
      %25 = vector.load %arg9[%c0_18, %c0_19] : memref<16x128xf32, #tpu.memory_space<vmem>>, vector<16x128xf32>
      tpu.vector_store %arg9[%c0_18, %c0_19], %24 {strides = array<i32>} : memref<16x128xf32, #tpu.memory_space<vmem>>, vector<16x128xf32>,
    } else {
    }
    %c0_i32_14 = arith.constant 0 : i32
    %20 = arith.cmpi eq, %arg1, %c0_i32_14 : i32
    %21 = arith.extui %20 : i1 to i32
    %c0_i32_15 = arith.constant 0 : i32
    %22 = arith.cmpi ne, %21, %c0_i32_15 : i32
    scf.if %22 {
      %c0_16 = arith.constant 0 : index
      %c0_17 = arith.constant 0 : index
      %23 = vector.load %arg9[%c0_16, %c0_17] : memref<16x128xf32, #tpu.memory_space<vmem>>, vector<16x128xf32>
      %c0_18 = arith.constant 0 : index
      %c0_19 = arith.constant 0 : index
      %24 = vector.load %arg8[%c0_18, %c0_19] : memref<1x128xf32, #tpu.memory_space<vmem>>, vector<1x128xf32>
      %25 = vector.broadcast %24 : vector<1x128xf32> to vector<16x128xf32>
      %26 = arith.addf %23, %25 : vector<16x128xf32>
      %c0_20 = arith.constant 0 : index
      %c0_21 = arith.constant 0 : index
      %27 = vector.load %arg2[%c0_20, %c0_21] : memref<16x128xf32, #tpu.memory_space<vmem>>, vector<16x128xf32>
      %28 = arith.addf %26, %27 : vector<16x128xf32>
      %c0_22 = arith.constant 0 : index
      %c0_23 = arith.constant 0 : index
      %29 = vector.load %arg9[%c0_22, %c0_23] : memref<16x128xf32, #tpu.memory_space<vmem>>, vector<16x128xf32>
      tpu.vector_store %arg9[%c0_22, %c0_23], %28 {strides = array<i32>} : memref<16x128xf32, #tpu.memory_space<vmem>>, vector<16x128xf32>,
    } else {
    }
    return
  }
  func.func @transform_0(%arg0: i32, %arg1: i32) -> (i32, i32) {
    %c0_i32 = arith.constant 0 : i32
    %c0_i32_0 = arith.constant 0 : i32
    return %arg0, %c0_i32 : i32, i32
  }
  func.func @transform_1(%arg0: i32, %arg1: i32) -> (i32, i32) {
    %c0_i32 = arith.constant 0 : i32
    %c0_i32_0 = arith.constant 0 : i32
    %c0_i32_1 = arith.constant 0 : i32
    return %c0_i32, %c0_i32_0 : i32, i32
  }
  func.func @transform_2(%arg0: i32, %arg1: i32) -> (i32, i32) {
    %c0_i32 = arith.constant 0 : i32
    %c0_i32_0 = arith.constant 0 : i32
    %c0_i32_1 = arith.constant 0 : i32
    return %c0_i32, %c0_i32_0 : i32, i32
  }
  func.func @transform_3(%arg0: i32, %arg1: i32) -> (i32, i32) {
    %c0_i32 = arith.constant 0 : i32
    %c0_i32_0 = arith.constant 0 : i32
    return %c0_i32, %arg1 : i32, i32
  }
  func.func @transform_4(%arg0: i32, %arg1: i32) -> (i32, i32) {
    %c0_i32 = arith.constant 0 : i32
    %c0_i32_0 = arith.constant 0 : i32
    return %c0_i32, %arg1 : i32, i32
  }
  func.func @transform_5(%arg0: i32, %arg1: i32) -> (i32, i32) {
    %c0_i32 = arith.constant 0 : i32
    %c0_i32_0 = arith.constant 0 : i32
    return %arg1, %c0_i32 : i32, i32
  }
  func.func @transform_6(%arg0: i32, %arg1: i32) -> (i32, i32) {
    %c0_i32 = arith.constant 0 : i32
    %c0_i32_0 = arith.constant 0 : i32
    %c0_i32_1 = arith.constant 0 : i32
    return %c0_i32, %c0_i32_0 : i32, i32
  }
  func.func @transform_7(%arg0: i32, %arg1: i32) -> (i32, i32) {
    %c0_i32 = arith.constant 0 : i32
    %c0_i32_0 = arith.constant 0 : i32
    return %arg0, %c0_i32 : i32, i32
  }
}

</mosaic_0001>

<llo_original>
// kernel: tpu_custom_call.1
$region0: #{tpu_custom_call.1}
  #allocation0 [shape = 'u32[]', space=smem, size = 0x4, offset = 0x4, fixed_abs, tag = 'smem constant byte address 0x4 - core index']
  #allocation1 [shape = 'u32[144,128]{1,0:T(1,128)}', space=vmem, size = 0x12000, scoped, tag = 'internal scratch']
  #allocation2 [shape = 'bf16[16,128]{1,0:T(8,128)(2,1)}', space=vmem, size = 0x1000, scoped, tag = 'scratch operand']
  %s0 = inlined_call_operand.hbm [shape: f32[16,128], index: 0, kind: input, shape index: {}]
  %s1 = inlined_call_operand.vmem [shape: f32[1,128], index: 1, kind: input, shape index: {}]
  %s2 = inlined_call_operand.hbm [shape: f32[1,128], index: 2, kind: input, shape index: {}]
  %s3 = inlined_call_operand.hbm [shape: bf16[128,256], index: 3, kind: input, shape index: {}]
  %s4 = inlined_call_operand.vmem [shape: f32[1,256], index: 4, kind: input, shape index: {}]
  %s5 = inlined_call_operand.hbm [shape: bf16[256,128], index: 5, kind: input, shape index: {}]
  %s6 = inlined_call_operand.vmem [shape: f32[1,128], index: 6, kind: input, shape index: {}]
  %s7 = inlined_call_operand.hbm [shape: f32[16,128], index: 7, kind: output, shape index: {}]
  %s8 = sld [smem:[#allocation0]]
  $region70: #{tpu_custom_call.1} parent=0
    _
  %s10 = ssub.s32 1, %s8
  %s11 = scalar_select 0, %s10, %s8
  $region1: #{tpu_custom_call.1} parent=0
    #allocation3 [shape = 'u8[8192]{0}', space=vmem, size = 0x2000, scoped, tag = 'input window, operand 0, single buffered']
    #allocation4 [shape = 's32[1]{0}', space=sflag, size = 0x4, scoped, tag = 'scoped memory for tpu_custom_call.1']
    #allocation5 [shape = 's32[1]{0}', space=sflag, size = 0x4, scoped, tag = 'scoped memory for tpu_custom_call.1']
    #allocation6 [shape = 'u8[512]{0}', space=vmem, size = 0x400, scoped, tag = 'input window, operand 2, single buffered']
    #allocation7 [shape = 's32[1]{0}', space=sflag, size = 0x4, scoped, tag = 'scoped memory for tpu_custom_call.1']
    #allocation8 [shape = 'u8[65536]{0}', space=vmem, size = 0x10000, scoped, tag = 'input window, operand 3, single buffered']
    #allocation9 [shape = 'u8[65536]{0}', space=vmem, size = 0x10000, scoped, tag = 'input window, operand 5, single buffered']
    #allocation10 [shape = 's32[1]{0}', space=sflag, size = 0x4, scoped, tag = 'scoped memory for tpu_custom_call.1']
    #allocation11 [shape = 'u8[8192]{0}', space=vmem, size = 0x2000, scoped, tag = 'output window, operand 0, single buffered']
    %12 = vsyncpa [#allocation4], 0
    %13 = vsyncpa [#allocation7], 0
    %14 = vsyncpa [#allocation10], 0
    %15 = vsyncpa [#allocation5], 0
    // Predicated region
    $region2: #{tpu_custom_call.1} parent=1 // pred_check
      _
    $region3: #{tpu_custom_call.1} parent=1 // pred_check_branch
      %17 = sbr.rel (0) target = $region5
    $region4: #{tpu_custom_call.1} parent=1 // pred_region
      %s19 = ssub.s32 256, 256
      %20 = vsyncadd [#allocation4], %s19
      %s21 = sshll.u32 [#allocation3], 4
      %s22 = int_to_ptr.vmem [resolvable:$true] %s21
      %27 = dma.hbm_to_vmem [thread:$0]  %s0, 256, %s22, [#allocation4], 128, 128, 8
    $region5: #{tpu_custom_call.1} parent=1 // pred_fallthru
      _
    // Predicated region
    $region6: #{tpu_custom_call.1} parent=1 // pred_check
      _
    $region7: #{tpu_custom_call.1} parent=1 // pred_check_branch
      %29 = sbr.rel (0) target = $region9
    $region8: #{tpu_custom_call.1} parent=1 // pred_region
      _
    $region9: #{tpu_custom_call.1} parent=1 // pred_fallthru
      _
    // Predicated region
    $region10: #{tpu_custom_call.1} parent=1 // pred_check
      _
    $region11: #{tpu_custom_call.1} parent=1 // pred_check_branch
      %31 = sbr.rel (0) target = $region13
    $region12: #{tpu_custom_call.1} parent=1 // pred_region
      %s33 = ssub.s32 16, 16
      %34 = vsyncadd [#allocation7], %s33
      %s36 = sshll.u32 [#allocation6], 4
      %s37 = int_to_ptr.vmem [resolvable:$true] %s36
      %39 = dma.hbm_to_vmem [thread:$0]  %s2, 16, %s37, [#allocation7]
    $region13: #{tpu_custom_call.1} parent=1 // pred_fallthru
      _
    // Predicated region
    $region14: #{tpu_custom_call.1} parent=1 // pred_check
      _
    $region15: #{tpu_custom_call.1} parent=1 // pred_check_branch
      %41 = sbr.rel (0) target = $region17
    $region16: #{tpu_custom_call.1} parent=1 // pred_region
      %s43 = ssub.s32 2048, 2048
      %44 = vsyncadd [#allocation7], %s43
      %s45 = sshll.u32 [#allocation8], 4
      %s46 = int_to_ptr.vmem [resolvable:$true] %s45
      %51 = dma.hbm_to_vmem [thread:$0]  %s3, 2048, %s46, [#allocation7], 128, 128, 8
    $region17: #{tpu_custom_call.1} parent=1 // pred_fallthru
      _
    // Predicated region
    $region18: #{tpu_custom_call.1} parent=1 // pred_check
      _
    $region19: #{tpu_custom_call.1} parent=1 // pred_check_branch
      %53 = sbr.rel (0) target = $region21
    $region20: #{tpu_custom_call.1} parent=1 // pred_region
      _
    $region21: #{tpu_custom_call.1} parent=1 // pred_fallthru
      _
    // Predicated region
    $region22: #{tpu_custom_call.1} parent=1 // pred_check
      _
    $region23: #{tpu_custom_call.1} parent=1 // pred_check_branch
      %55 = sbr.rel (0) target = $region25
    $region24: #{tpu_custom_call.1} parent=1 // pred_region
      %s57 = ssub.s32 2048, 2048
      %58 = vsyncadd [#allocation10], %s57
      %s59 = sshll.u32 [#allocation9], 4
      %s60 = int_to_ptr.vmem [resolvable:$true] %s59
      %65 = dma.hbm_to_vmem [thread:$0]  %s5, 2048, %s60, [#allocation10], 64, 64, 4
    $region25: #{tpu_custom_call.1} parent=1 // pred_fallthru
      _
    // Predicated region
    $region26: #{tpu_custom_call.1} parent=1 // pred_check
      _
    $region27: #{tpu_custom_call.1} parent=1 // pred_check_branch
      %67 = sbr.rel (0) target = $region29
    $region28: #{tpu_custom_call.1} parent=1 // pred_region
      _
    $region29: #{tpu_custom_call.1} parent=1 // pred_fallthru
      _
    // Predicated region
    $region30: #{tpu_custom_call.1} parent=1 // pred_check
      _
    $region31: #{tpu_custom_call.1} parent=1 // pred_check_branch
      %69 = sbr.rel (0) target = $region33
    $region32: #{tpu_custom_call.1} parent=1 // pred_region
      %70 = dma.done [#allocation4], 256
    $region33: #{tpu_custom_call.1} parent=1 // pred_fallthru
      _
    // Predicated region
    $region34: #{tpu_custom_call.1} parent=1 // pred_check
      _
    $region35: #{tpu_custom_call.1} parent=1 // pred_check_branch
      %72 = sbr.rel (0) target = $region37
    $region36: #{tpu_custom_call.1} parent=1 // pred_region
      %73 = dma.done [#allocation7], 16
    $region37: #{tpu_custom_call.1} parent=1 // pred_fallthru
      _
    // Predicated region
    $region38: #{tpu_custom_call.1} parent=1 // pred_check
      _
    $region39: #{tpu_custom_call.1} parent=1 // pred_check_branch
      %75 = sbr.rel (0) target = $region41
    $region40: #{tpu_custom_call.1} parent=1 // pred_region
      %76 = dma.done [#allocation7], 2048
    $region41: #{tpu_custom_call.1} parent=1 // pred_fallthru
      _
    // Predicated region
    $region42: #{tpu_custom_call.1} parent=1 // pred_check
      _
    $region43: #{tpu_custom_call.1} parent=1 // pred_check_branch
      %78 = sbr.rel (0) target = $region45
    $region44: #{tpu_custom_call.1} parent=1 // pred_region
      %79 = dma.done [#allocation10], 2048
    $region45: #{tpu_custom_call.1} parent=1 // pred_fallthru
      _
    %p81 = scmp.eq.s32.totalorder 0, 0
    // Predicated region
    $region46: #{tpu_custom_call.1} parent=1 // pred_check
      %p82 = pneg %p81
    $region47: #{tpu_custom_call.1} parent=1 // pred_check_branch
      %84 = sbr.rel (%p82) target = $region49
    $region48: #{tpu_custom_call.1} parent=1 // pred_region
      %v85 = vld [vmem:[#allocation3] sm:$0xff]
      %v86 = vld [vmem:[#allocation3 + $0x8] sm:$0xff]
      %87 = vadd.xlane.f32.xlu0 %v85
      %v88 = vpop.xlane.xlu0 %87
      %89 = vadd.xlane.f32.xlu0 %v86
      %v90 = vpop.xlane.xlu0 %89
      %v91 = vrcp.pop 128.0
      %v92 = vmul.f32 %v88, %v91
      %v93 = vmul.f32 %v90, %v91
      %v94 = vsub.f32 %v85, %v92
      %v95 = vsub.f32 %v86, %v93
      %v96 = vmul.f32 %v94, %v94
      %v97 = vmul.f32 %v95, %v95
      %98 = vadd.xlane.f32.xlu0 %v96
      %v99 = vpop.xlane.xlu0 %98
      %100 = vadd.xlane.f32.xlu0 %v97
      %v101 = vpop.xlane.xlu0 %100
      %v102 = vrcp.pop 127.0
      %v103 = vmul.f32 %v99, %v102
      %v104 = vmul.f32 %v101, %v102
      %v105 = vrsqrt.pop %v103
      %v106 = vmul.f32 %v103, %v105
      %vm107 = vcmp.eq.f32.partialorder %v103, inf
      %v108 = vsel %vm107, %v103, %v106
      %vm109 = vcmp.eq.f32.partialorder %v103, 0.0
      %v110 = vand.u32 %v103, 2147483648
      %v111 = vsel %vm109, %v110, %v108
      %v112 = vrsqrt.pop %v104
      %v113 = vmul.f32 %v104, %v112
      %vm114 = vcmp.eq.f32.partialorder %v104, inf
      %v115 = vsel %vm114, %v104, %v113
      %vm116 = vcmp.eq.f32.partialorder %v104, 0.0
      %v117 = vand.u32 %v104, 2147483648
      %v118 = vsel %vm116, %v117, %v115
      %v119 = vadd.f32 %v111, 1e-06
      %v120 = vadd.f32 %v118, 1e-06
      %v121 = vrcp.pop %v119
      %v122 = vrcp.pop %v120
      %v123 = vld [vmem:[%s1] sm:$0x1]
      %v125 = vlaneseq
      %v126 = vshrl.u32 %v125, 7
      %v127 = vsub.s32 0, %v126
      %v128 = vrot.slane %v123, %v127
      %v130 = vmul.f32 %v128, %v121
      %v131 = vmul.f32 %v128, %v122
      %v132 = vmul.f32 %v94, %v130
      %v133 = vmul.f32 %v95, %v131
      %v134 = vld [vmem:[#allocation6] sm:$0x1]
      %v136 = vlaneseq
      %v137 = vshrl.u32 %v136, 7
      %v138 = vsub.s32 0, %v137
      %v139 = vrot.slane %v134, %v138
      %v141 = vadd.f32 %v132, %v139
      %v142 = vadd.f32 %v133, %v139
      %v143 = vpack.c.bf16 %v142, %v141
      %v145 = vunpack.c.l.b16 %v143
      %v146 = vunpack.c.h.b16 %v143
      %v147 = vpack.c.b16 %v145, %v145
      %v148 = vpack.c.b16 %v146, %v146
      %151 = vst [vmem:[#allocation2] sm:$0xf] %v147
      %152 = vst [vmem:[#allocation2 + $0x4] sm:$0xf] %v148
    $region49: #{tpu_custom_call.1} parent=1 // pred_fallthru
      _
    %v153 = vld [vmem:[#allocation2] sm:$0xf]
    %v154 = vld [vmem:[#allocation2 + $0x4] sm:$0xf]
    %v155 = vld [vmem:[#allocation8] sm:$0xff]
    %v156 = vld [vmem:[#allocation8 + $0x8] sm:$0xff]
    %v157 = vld [vmem:[#allocation8 + $0x10] sm:$0xff]
    %v158 = vld [vmem:[#allocation8 + $0x18] sm:$0xff]
    %v159 = vld [vmem:[#allocation8 + $0x20] sm:$0xff]
    %v160 = vld [vmem:[#allocation8 + $0x28] sm:$0xff]
    %v161 = vld [vmem:[#allocation8 + $0x30] sm:$0xff]
    %v162 = vld [vmem:[#allocation8 + $0x38] sm:$0xff]
    %v163 = vld [vmem:[#allocation8 + $0x40] sm:$0xff]
    %v164 = vld [vmem:[#allocation8 + $0x48] sm:$0xff]
    %v165 = vld [vmem:[#allocation8 + $0x50] sm:$0xff]
    %v166 = vld [vmem:[#allocation8 + $0x58] sm:$0xff]
    %v167 = vld [vmem:[#allocation8 + $0x60] sm:$0xff]
    %v168 = vld [vmem:[#allocation8 + $0x68] sm:$0xff]
    %v169 = vld [vmem:[#allocation8 + $0x70] sm:$0xff]
    %v170 = vld [vmem:[#allocation8 + $0x78] sm:$0xff]
    %v171 = vld [vmem:[%s4] sm:$0x3]
    %v173 = vlaneseq
    %v174 = vshrl.u32 %v173, 7
    %v175 = vsub.s32 0, %v174
    %v176 = vrot.slane %v171, %v175
    %v177 = vlaneseq
    %v178 = vshrl.u32 %v177, 7
    %v179 = vsub.s32 1, %v178
    %v180 = vrot.slane %v171, %v179
    %v185 = vunpack.c.l.b16 %v153
    %v186 = vunpack.c.l.b16 %v154
    %v187 = vpack.c.b16 %v186, %v185
    %v205 = vunpack.c.l.b16 %v155
    %v206 = vunpack.c.h.b16 %v155
    %v207 = vunpack.c.l.b16 %v156
    %v208 = vunpack.c.h.b16 %v156
    %v209 = vunpack.c.l.b16 %v157
    %v210 = vunpack.c.h.b16 %v157
    %v211 = vunpack.c.l.b16 %v158
    %v212 = vunpack.c.h.b16 %v158
    %v213 = vunpack.c.l.b16 %v159
    %v214 = vunpack.c.h.b16 %v159
    %v215 = vunpack.c.l.b16 %v160
    %v216 = vunpack.c.h.b16 %v160
    %v217 = vunpack.c.l.b16 %v161
    %v218 = vunpack.c.h.b16 %v161
    %v219 = vunpack.c.l.b16 %v162
    %v220 = vunpack.c.h.b16 %v162
    %v221 = vunpack.c.l.b16 %v163
    %v222 = vunpack.c.h.b16 %v163
    %v223 = vunpack.c.l.b16 %v164
    %v224 = vunpack.c.h.b16 %v164
    %v225 = vunpack.c.l.b16 %v165
    %v226 = vunpack.c.h.b16 %v165
    %v227 = vunpack.c.l.b16 %v166
    %v228 = vunpack.c.h.b16 %v166
    %v229 = vunpack.c.l.b16 %v167
    %v230 = vunpack.c.h.b16 %v167
    %v231 = vunpack.c.l.b16 %v168
    %v232 = vunpack.c.h.b16 %v168
    %v233 = vunpack.c.l.b16 %v169
    %v234 = vunpack.c.h.b16 %v169
    %v235 = vunpack.c.l.b16 %v170
    %v236 = vunpack.c.h.b16 %v170
    %v237 = vpack.c.b16 %v207, %v205
    %v238 = vpack.c.b16 %v208, %v206
    %v239 = vpack.c.b16 %v211, %v209
    %v240 = vpack.c.b16 %v212, %v210
    %v241 = vpack.c.b16 %v215, %v213
    %v242 = vpack.c.b16 %v216, %v214
    %v243 = vpack.c.b16 %v219, %v217
    %v244 = vpack.c.b16 %v220, %v218
    %v245 = vpack.c.b16 %v223, %v221
    %v246 = vpack.c.b16 %v224, %v222
    %v247 = vpack.c.b16 %v227, %v225
    %v248 = vpack.c.b16 %v228, %v226
    %v249 = vpack.c.b16 %v231, %v229
    %v250 = vpack.c.b16 %v232, %v230
    %v251 = vpack.c.b16 %v235, %v233
    %v252 = vpack.c.b16 %v236, %v234
    %269 = vmatprep.subr.bf16.mxu0 %v252
    %270 = vmatpush1.bf16.msra.mxu0 %v251
    %271 = vmatprep.subr.bf16.mxu0 %v250
    %272 = vmatpush1.bf16.msra.mxu0 %v249
    %273 = vmatprep.subr.bf16.mxu0 %v248
    %274 = vmatpush1.bf16.msra.mxu0 %v247
    %275 = vmatprep.subr.bf16.mxu0 %v246
    %276 = vmatpush1.bf16.msra.mxu0 %v245
    %277 = vmatprep.subr.bf16.mxu0 %v244
    %278 = vmatpush1.bf16.msra.mxu0 %v243
    %279 = vmatprep.subr.bf16.mxu0 %v242
    %280 = vmatpush1.bf16.msra.mxu0 %v241
    %281 = vmatprep.subr.bf16.mxu0 %v240
    %282 = vmatpush1.bf16.msra.mxu0 %v239
    %283 = vmatprep.subr.bf16.mxu0 %v238
    %284 = vmatpush1.bf16.msra.mxu0 %v237
    %285 = vmatprep.subr.bf16.mxu0 0
    %286 = vmatpush2.bf16.msra.mxu0 0
    %287 = vmatprep.subr.bf16.mxu0 0
    %288 = vmatpush2.bf16.msra.mxu0 0
    %289 = vmatprep.subr.bf16.mxu0 0
    %290 = vmatpush2.bf16.msra.mxu0 0
    %291 = vmatprep.subr.bf16.mxu0 0
    %292 = vmatpush2.bf16.msra.mxu0 0
    %293 = vmatprep.subr.bf16.mxu0 0
    %294 = vmatpush2.bf16.msra.mxu0 0
    %295 = vmatprep.subr.bf16.mxu0 0
    %296 = vmatpush2.bf16.msra.mxu0 0
    %297 = vmatprep.subr.bf16.mxu0 0
    %298 = vmatpush2.bf16.msra.mxu0 0
    %299 = vmatprep.subr.bf16.mxu0 0
    %300 = vmatpush2.bf16.msra.mxu0 0
    %301 = vmatprep.mubr.bf16.mxu0 0
    %302 = vmatmul.mubr.bf16.gmra.mxu0 %v187
    %v303 = vpop.f32.mrf.mxu0
    %v304 = vadd.f32 %v176, %v303
    %v305 = vpop.f32.mrf.mxu0
    %v306 = vadd.f32 %v180, %v305
    %v307 = vpop.f32.mrf.mxu0
    %v308 = vadd.f32 %v176, %v307
    %v309 = vpop.f32.mrf.mxu0
    %v310 = vadd.f32 %v180, %v309
    %311 = vdwg.mxu0
    %v312 = vmax.f32 %v304, 0.0
    %v313 = vmax.f32 %v306, 0.0
    %v314 = vmax.f32 %v308, 0.0
    %v315 = vmax.f32 %v310, 0.0
    %v316 = vpack.c.bf16 %v314, %v312
    %v317 = vpack.c.bf16 %v315, %v313
    %v318 = vld [vmem:[#allocation9] sm:$0xf]
    %v319 = vld [vmem:[#allocation9 + $0x4] sm:$0xf]
    %v320 = vld [vmem:[#allocation9 + $0x8] sm:$0xf]
    %v321 = vld [vmem:[#allocation9 + $0xc] sm:$0xf]
    %v322 = vld [vmem:[#allocation9 + $0x10] sm:$0xf]
    %v323 = vld [vmem:[#allocation9 + $0x14] sm:$0xf]
    %v324 = vld [vmem:[#allocation9 + $0x18] sm:$0xf]
    %v325 = vld [vmem:[#allocation9 + $0x1c] sm:$0xf]
    %v326 = vld [vmem:[#allocation9 + $0x20] sm:$0xf]
    %v327 = vld [vmem:[#allocation9 + $0x24] sm:$0xf]
    %v328 = vld [vmem:[#allocation9 + $0x28] sm:$0xf]
    %v329 = vld [vmem:[#allocation9 + $0x2c] sm:$0xf]
    %v330 = vld [vmem:[#allocation9 + $0x30] sm:$0xf]
    %v331 = vld [vmem:[#allocation9 + $0x34] sm:$0xf]
    %v332 = vld [vmem:[#allocation9 + $0x38] sm:$0xf]
    %v333 = vld [vmem:[#allocation9 + $0x3c] sm:$0xf]
    %v334 = vld [vmem:[#allocation9 + $0x40] sm:$0xf]
    %v335 = vld [vmem:[#allocation9 + $0x44] sm:$0xf]
    %v336 = vld [vmem:[#allocation9 + $0x48] sm:$0xf]
    %v337 = vld [vmem:[#allocation9 + $0x4c] sm:$0xf]
    %v338 = vld [vmem:[#allocation9 + $0x50] sm:$0xf]
    %v339 = vld [vmem:[#allocation9 + $0x54] sm:$0xf]
    %v340 = vld [vmem:[#allocation9 + $0x58] sm:$0xf]
    %v341 = vld [vmem:[#allocation9 + $0x5c] sm:$0xf]
    %v342 = vld [vmem:[#allocation9 + $0x60] sm:$0xf]
    %v343 = vld [vmem:[#allocation9 + $0x64] sm:$0xf]
    %v344 = vld [vmem:[#allocation9 + $0x68] sm:$0xf]
    %v345 = vld [vmem:[#allocation9 + $0x6c] sm:$0xf]
    %v346 = vld [vmem:[#allocation9 + $0x70] sm:$0xf]
    %v347 = vld [vmem:[#allocation9 + $0x74] sm:$0xf]
    %v348 = vld [vmem:[#allocation9 + $0x78] sm:$0xf]
    %v349 = vld [vmem:[#allocation9 + $0x7c] sm:$0xf]
    %v382 = vunpack.c.l.b16 %v318
    %v383 = vunpack.c.l.b16 %v319
    %v384 = vunpack.c.l.b16 %v320
    %v385 = vunpack.c.l.b16 %v321
    %v386 = vunpack.c.l.b16 %v322
    %v387 = vunpack.c.l.b16 %v323
    %v388 = vunpack.c.l.b16 %v324
    %v389 = vunpack.c.l.b16 %v325
    %v390 = vunpack.c.l.b16 %v326
    %v391 = vunpack.c.l.b16 %v327
    %v392 = vunpack.c.l.b16 %v328
    %v393 = vunpack.c.l.b16 %v329
    %v394 = vunpack.c.l.b16 %v330
    %v395 = vunpack.c.l.b16 %v331
    %v396 = vunpack.c.l.b16 %v332
    %v397 = vunpack.c.l.b16 %v333
    %v398 = vunpack.c.l.b16 %v334
    %v399 = vunpack.c.l.b16 %v335
    %v400 = vunpack.c.l.b16 %v336
    %v401 = vunpack.c.l.b16 %v337
    %v402 = vunpack.c.l.b16 %v338
    %v403 = vunpack.c.l.b16 %v339
    %v404 = vunpack.c.l.b16 %v340
    %v405 = vunpack.c.l.b16 %v341
    %v406 = vunpack.c.l.b16 %v342
    %v407 = vunpack.c.l.b16 %v343
    %v408 = vunpack.c.l.b16 %v344
    %v409 = vunpack.c.l.b16 %v345
    %v410 = vunpack.c.l.b16 %v346
    %v411 = vunpack.c.l.b16 %v347
    %v412 = vunpack.c.l.b16 %v348
    %v413 = vunpack.c.l.b16 %v349
    %v414 = vpack.c.b16 %v383, %v382
    %v415 = vpack.c.b16 %v385, %v384
    %v416 = vpack.c.b16 %v387, %v386
    %v417 = vpack.c.b16 %v389, %v388
    %v418 = vpack.c.b16 %v391, %v390
    %v419 = vpack.c.b16 %v393, %v392
    %v420 = vpack.c.b16 %v395, %v394
    %v421 = vpack.c.b16 %v397, %v396
    %v422 = vpack.c.b16 %v399, %v398
    %v423 = vpack.c.b16 %v401, %v400
    %v424 = vpack.c.b16 %v403, %v402
    %v425 = vpack.c.b16 %v405, %v404
    %v426 = vpack.c.b16 %v407, %v406
    %v427 = vpack.c.b16 %v409, %v408
    %v428 = vpack.c.b16 %v411, %v410
    %v429 = vpack.c.b16 %v413, %v412
    %446 = vmatprep.subr.bf16.mxu0 0
    %447 = vmatpush1.bf16.msra.mxu0 %v421
    %448 = vmatprep.subr.bf16.mxu0 0
    %449 = vmatpush1.bf16.msra.mxu0 %v420
    %450 = vmatprep.subr.bf16.mxu0 0
    %451 = vmatpush1.bf16.msra.mxu0 %v419
    %452 = vmatprep.subr.bf16.mxu0 0
    %453 = vmatpush1.bf16.msra.mxu0 %v418
    %454 = vmatprep.subr.bf16.mxu0 0
    %455 = vmatpush1.bf16.msra.mxu0 %v417
    %456 = vmatprep.subr.bf16.mxu0 0
    %457 = vmatpush1.bf16.msra.mxu0 %v416
    %458 = vmatprep.subr.bf16.mxu0 0
    %459 = vmatpush1.bf16.msra.mxu0 %v415
    %460 = vmatprep.subr.bf16.mxu0 0
    %461 = vmatpush1.bf16.msra.mxu0 %v414
    %462 = vmatprep.subr.bf16.mxu0 0
    %463 = vmatpush2.bf16.msra.mxu0 %v429
    %464 = vmatprep.subr.bf16.mxu0 0
    %465 = vmatpush2.bf16.msra.mxu0 %v428
    %466 = vmatprep.subr.bf16.mxu0 0
    %467 = vmatpush2.bf16.msra.mxu0 %v427
    %468 = vmatprep.subr.bf16.mxu0 0
    %469 = vmatpush2.bf16.msra.mxu0 %v426
    %470 = vmatprep.subr.bf16.mxu0 0
    %471 = vmatpush2.bf16.msra.mxu0 %v425
    %472 = vmatprep.subr.bf16.mxu0 0
    %473 = vmatpush2.bf16.msra.mxu0 %v424
    %474 = vmatprep.subr.bf16.mxu0 0
    %475 = vmatpush2.bf16.msra.mxu0 %v423
    %476 = vmatprep.subr.bf16.mxu0 0
    %477 = vmatpush2.bf16.msra.mxu0 %v422
    %478 = vmatprep.mubr.bf16.mxu0 %v317
    %479 = vmatmul.mubr.bf16.gmra.mxu0 %v316
    %v480 = vpop.f32.mrf.mxu0
    %v481 = vadd.f32 0.0, %v480
    %v482 = vpop.f32.mrf.mxu0
    %v483 = vpop.f32.mrf.mxu0
    %v484 = vadd.f32 0.0, %v483
    %v485 = vpop.f32.mrf.mxu0
    %486 = vdwg.mxu0
    // Predicated region
    $region50: #{tpu_custom_call.1} parent=1 // pred_check
      %p487 = pneg %p81
    $region51: #{tpu_custom_call.1} parent=1 // pred_check_branch
      %489 = sbr.rel (%p487) target = $region53
    $region52: #{tpu_custom_call.1} parent=1 // pred_region
      %490 = vst [vmem:[#allocation11] sm:$0xff] %v481
      %491 = vst [vmem:[#allocation11 + $0x8] sm:$0xff] %v484
    $region53: #{tpu_custom_call.1} parent=1 // pred_fallthru
      _
    %p492 = scmp.gt.s32.totalorder 0, 0
    // Predicated region
    $region54: #{tpu_custom_call.1} parent=1 // pred_check
      %p493 = pneg %p492
    $region55: #{tpu_custom_call.1} parent=1 // pred_check_branch
      %495 = sbr.rel (%p493) target = $region57
    $region56: #{tpu_custom_call.1} parent=1 // pred_region
      %v496 = vld [vmem:[#allocation11] sm:$0xff]
      %v497 = vld [vmem:[#allocation11 + $0x8] sm:$0xff]
      %v498 = vadd.f32 %v496, %v481
      %v499 = vadd.f32 %v497, %v484
      %500 = vst [vmem:[#allocation11] sm:$0xff] %v498
      %501 = vst [vmem:[#allocation11 + $0x8] sm:$0xff] %v499
    $region57: #{tpu_custom_call.1} parent=1 // pred_fallthru
      _
    // Predicated region
    $region58: #{tpu_custom_call.1} parent=1 // pred_check
      %p502 = pneg %p81
    $region59: #{tpu_custom_call.1} parent=1 // pred_check_branch
      %504 = sbr.rel (%p502) target = $region61
    $region60: #{tpu_custom_call.1} parent=1 // pred_region
      %v505 = vld [vmem:[#allocation11] sm:$0xff]
      %v506 = vld [vmem:[#allocation11 + $0x8] sm:$0xff]
      %v507 = vld [vmem:[%s6] sm:$0x1]
      %v509 = vlaneseq
      %v510 = vshrl.u32 %v509, 7
      %v511 = vsub.s32 0, %v510
      %v512 = vrot.slane %v507, %v511
      %v514 = vadd.f32 %v505, %v512
      %v515 = vadd.f32 %v506, %v512
      %v516 = vld [vmem:[#allocation3] sm:$0xff]
      %v517 = vld [vmem:[#allocation3 + $0x8] sm:$0xff]
      %v518 = vadd.f32 %v514, %v516
      %v519 = vadd.f32 %v515, %v517
      %520 = vst [vmem:[#allocation11] sm:$0xff] %v518
      %521 = vst [vmem:[#allocation11 + $0x8] sm:$0xff] %v519
    $region61: #{tpu_custom_call.1} parent=1 // pred_fallthru
      _
    // Predicated region
    $region62: #{tpu_custom_call.1} parent=1 // pred_check
      _
    $region63: #{tpu_custom_call.1} parent=1 // pred_check_branch
      %523 = sbr.rel (0) target = $region65
    $region64: #{tpu_custom_call.1} parent=1 // pred_region
      %s525 = ssub.s32 256, 256
      %526 = vsyncadd [#allocation5], %s525
      %s527 = sshll.u32 [#allocation11], 4
      %s528 = int_to_ptr.vmem [resolvable:$true] %s527
      %533 = dma.vmem_to_hbm [thread:$0]  %s528, 256, %s7, [#allocation5], 128, 128, 8
    $region65: #{tpu_custom_call.1} parent=1 // pred_fallthru
      _
    // Predicated region
    $region66: #{tpu_custom_call.1} parent=1 // pred_check
      _
    $region67: #{tpu_custom_call.1} parent=1 // pred_check_branch
      %535 = sbr.rel (0) target = $region69
    $region68: #{tpu_custom_call.1} parent=1 // pred_region
      %536 = dma.done [#allocation5], 256
    $region69: #{tpu_custom_call.1} parent=1 // pred_fallthru
      _
    %537 = vsyncpa [#allocation4], 1
    %538 = vsyncpa [#allocation7], 1
    %539 = vsyncpa [#allocation10], 1
    %540 = vsyncpa [#allocation5], 1

</llo_original>
